<compile_context>
chip_gen: v5e
topology: v5e:2x2
jax: 0.10.0
libtpu: 0.0.40
codegen_flags: <defaults>
</compile_context>

<pallas_src>
import functools

import jax
import jax.numpy as jnp
from jax.experimental import pallas as pl
from jax.experimental.pallas import tpu as pltpu


# ---------------------------------------------------------------------------
# Hardware-aware sizing helpers
# ---------------------------------------------------------------------------

def _vmem_capacity_bytes():
    """Physical VMEM capacity; conservative (v7x-sized) fallback if unknown."""
    try:
        info = pltpu.get_tpu_info()
        cap = getattr(info, "vmem_capacity_bytes", None)
        if cap:
            return int(cap)
    except Exception:
        pass
    return 64 << 20


def _pick_tile_n(N, C, itemsize, target_block_bytes=2 << 20):
    """Largest multiple of 128 dividing N s.t. the (C, tile_n) block ~ target bytes."""
    if N % 128 != 0:
        return N  # legal: block dim equal to the full array dim
    max_lanes = max(128, (target_block_bytes // max(1, C * itemsize)) // 128 * 128)
    best, t, limit = 128, 128, min(N, max_lanes)
    while t <= limit:
        if N % t == 0:
            best = t
        t += 128
    return best


# ---------------------------------------------------------------------------
# Kernel bodies
# ---------------------------------------------------------------------------

def _mlp_attention_scale(avg, mx, w1, b1, w2, b2):
    """sigmoid(MLP(avg) + MLP(mx)) with the second matvec shared. All f32, (C,1)."""
    h = (jnp.maximum(jnp.dot(w1, avg, preferred_element_type=jnp.float32) + b1, 0.0)
         + jnp.maximum(jnp.dot(w1, mx, preferred_element_type=jnp.float32) + b1, 0.0))
    att = jnp.dot(w2, h, preferred_element_type=jnp.float32) + 2.0 * b2
    return 1.0 / (1.0 + jnp.exp(-att))  # sigmoid (EUP)


def _fused_kernel(x_ref, w1_ref, b1_ref, w2_ref, b2_ref, o_ref, *, inv_n):
    # x_ref/o_ref: (1, C, N) — one full batch element. Weights: PyTorch (out, in).
    xb = x_ref[0]                                            # (C, N), native dtype
    # Fold the f32 cast into the sum reduce; max is exact in the native dtype.
    avg = jnp.sum(xb.astype(jnp.float32), axis=-1, keepdims=True) * inv_n
    mx = jnp.max(xb, axis=-1, keepdims=True).astype(jnp.float32)
    scale = _mlp_attention_scale(
        avg, mx,
        w1_ref[...].astype(jnp.float32), b1_ref[...].astype(jnp.float32),
        w2_ref[...].astype(jnp.float32), b2_ref[...].astype(jnp.float32))
    # Multiply in the input dtype (bf16-native on v6e/v7x; identical for f32).
    o_ref[0] = xb * scale.astype(xb.dtype)


def _pool_mlp_kernel(x_ref, w1_ref, b1_ref, w2_ref, b2_ref, s_ref,
                     sum_acc, max_acc, *, inv_n):
    # Two-pass fallback, pass 1: pooled reductions + MLP + sigmoid -> (1, C, 1).
    nk = pl.program_id(1)

    @pl.when(nk == 0)
    def _():
        sum_acc[...] = jnp.zeros_like(sum_acc)
        max_acc[...] = jnp.full_like(max_acc, -jnp.inf)

    xb = x_ref[0]                                            # (C, TN), native dtype
    sum_acc[...] += jnp.sum(xb.astype(jnp.float32), axis=-1, keepdims=True)
    max_acc[...] = jnp.maximum(
        max_acc[...], jnp.max(xb, axis=-1, keepdims=True).astype(jnp.float32))

    @pl.when(nk == pl.num_programs(1) - 1)
    def _():
        scale = _mlp_attention_scale(
            sum_acc[...] * inv_n, max_acc[...],
            w1_ref[...].astype(jnp.float32), b1_ref[...].astype(jnp.float32),
            w2_ref[...].astype(jnp.float32), b2_ref[...].astype(jnp.float32))
        s_ref[0] = scale.astype(s_ref.dtype)


def _apply_scale_kernel(x_ref, s_ref, o_ref):
    # Two-pass fallback, pass 2: broadcast-multiply in the input dtype.
    s = s_ref[0].astype(o_ref.dtype)                         # (C, 1)
    o_ref[0] = x_ref[0] * s


# ---------------------------------------------------------------------------
# Wrapper
# ---------------------------------------------------------------------------

def channel_gate_pallas(x, w1, b1, w2, b2, tile_n=None, force_two_pass=False):
    """ChannelGate forward.

    x : (B, C, H, W)
    w1: (Cr, C), b1: (Cr,)   -- first Linear (PyTorch (out, in) layout)
    w2: (C, Cr), b2: (C,)    -- second Linear
    Returns (B, C, H, W).
    """
    B, C, H, W = x.shape
    Cr = w1.shape[0]
    N = H * W
    x3 = x.reshape(B, C, N)                                  # free view of NCHW
    itemsize = jnp.dtype(x.dtype).itemsize

    b1c = b1.reshape(Cr, 1)
    b2c = b2.reshape(C, 1)

    vmem_cap = _vmem_capacity_bytes()
    vmem_limit = int(min(vmem_cap * 3 // 4, 96 << 20))       # ~48 MiB v7x, 96 MiB v5e/v6e

    # ---- Fused single-pass path: per-batch (C, N) slab resident in VMEM ----
    block_bytes = C * N * itemsize
    fused_block_limit = min(8 << 20, vmem_limit // 6)        # 2x in + 2x out buffers + margin
    use_fused = (not force_two_pass) and block_bytes <= fused_block_limit

    if use_fused:
        out = pl.pallas_call(
            functools.partial(_fused_kernel, inv_n=1.0 / float(N)),
            out_shape=jax.ShapeDtypeStruct((B, C, N), x.dtype),
            grid_spec=pltpu.PrefetchScalarGridSpec(
                num_scalar_prefetch=0,
                grid=(B,),
                in_specs=[
                    pl.BlockSpec((1, C, N), lambda b: (b, 0, 0)),
                    pl.BlockSpec((Cr, C), lambda b: (0, 0)),
                    pl.BlockSpec((Cr, 1), lambda b: (0, 0)),
                    pl.BlockSpec((C, Cr), lambda b: (0, 0)),
                    pl.BlockSpec((C, 1), lambda b: (0, 0)),
                ],
                out_specs=pl.BlockSpec((1, C, N), lambda b: (b, 0, 0)),
            ),
            compiler_params=pltpu.CompilerParams(
                dimension_semantics=("parallel",),
                vmem_limit_bytes=vmem_limit),
        )(x3, w1, b1c, w2, b2c)
        return out.reshape(B, C, H, W)

    # ---- Two-pass tiled fallback for large slabs ----
    if tile_n is None:
        tile_n = _pick_tile_n(N, C, itemsize)
    assert N % tile_n == 0, "tile_n must divide H*W"
    NK = N // tile_n

    # Pass 1: pooled reductions + MLP + sigmoid -> per-channel scale.
    scale = pl.pallas_call(
        functools.partial(_pool_mlp_kernel, inv_n=1.0 / float(N)),
        out_shape=jax.ShapeDtypeStruct((B, C, 1), jnp.float32),
        grid_spec=pltpu.PrefetchScalarGridSpec(
            num_scalar_prefetch=0,
            grid=(B, NK),
            in_specs=[
                pl.BlockSpec((1, C, tile_n), lambda b, nk: (b, 0, nk)),
                pl.BlockSpec((Cr, C), lambda b, nk: (0, 0)),
                pl.BlockSpec((Cr, 1), lambda b, nk: (0, 0)),
                pl.BlockSpec((C, Cr), lambda b, nk: (0, 0)),
                pl.BlockSpec((C, 1), lambda b, nk: (0, 0)),
            ],
            out_specs=pl.BlockSpec((1, C, 1), lambda b, nk: (b, 0, 0)),
            scratch_shapes=[
                pltpu.VMEM((C, 1), jnp.float32),   # running sum
                pltpu.VMEM((C, 1), jnp.float32),   # running max
            ],
        ),
        compiler_params=pltpu.CompilerParams(
            dimension_semantics=("parallel", "arbitrary"),
            vmem_limit_bytes=vmem_limit),
    )(x3, w1, b1c, w2, b2c)

    # Pass 2: broadcast-multiply x by the per-channel scale (fully parallel).
    out = pl.pallas_call(
        _apply_scale_kernel,
        out_shape=jax.ShapeDtypeStruct((B, C, N), x.dtype),
        grid_spec=pltpu.PrefetchScalarGridSpec(
            num_scalar_prefetch=0,
            grid=(B, NK),
            in_specs=[
                pl.BlockSpec((1, C, tile_n), lambda b, nk: (b, 0, nk)),
                pl.BlockSpec((1, C, 1), lambda b, nk: (b, 0, 0)),
            ],
            out_specs=pl.BlockSpec((1, C, tile_n), lambda b, nk: (b, 0, nk)),
        ),
        compiler_params=pltpu.CompilerParams(
            dimension_semantics=("parallel", "parallel"),
            vmem_limit_bytes=vmem_limit),
    )(x3, scale)

    return out.reshape(B, C, H, W)


# ---------------------------------------------------------------------------
# Pure-JAX reference and self-test
# ---------------------------------------------------------------------------

def _channel_gate_ref(x, w1, b1, w2, b2):
    """Pure-JAX reference matching the PyTorch module."""
    avg = jnp.mean(x, axis=(2, 3))                           # (B, C)
    mx = jnp.max(x, axis=(2, 3))                             # (B, C)

    def mlp(v):
        h = jnp.maximum(v @ w1.T + b1, 0.0)
        return h @ w2.T + b2

    att = mlp(avg) + mlp(mx)                                 # (B, C)
    scale = jax.nn.sigmoid(att)[:, :, None, None]
    return (x * scale).astype(x.dtype)


if __name__ == "__main__":
    key = jax.random.PRNGKey(0)
    k_x, k_w1, k_b1, k_w2, k_b2 = jax.random.split(key, 5)

    # Small shapes consistent with the module: gate_channels=64, reduction=16.
    B, C, H, W = 2, 64, 16, 16
    reduction_ratio = 16
    Cr = C // reduction_ratio

    x = jax.random.normal(k_x, (B, C, H, W), dtype=jnp.float32)
    w1 = 0.2 * jax.random.normal(k_w1, (Cr, C), dtype=jnp.float32)
    b1 = 0.1 * jax.random.normal(k_b1, (Cr,), dtype=jnp.float32)
    w2 = 0.2 * jax.random.normal(k_w2, (C, Cr), dtype=jnp.float32)
    b2 = 0.1 * jax.random.normal(k_b2, (C,), dtype=jnp.float32)

    ref = _channel_gate_ref(x, w1, b1, w2, b2)

    # Fused single-pass path (default for this slab size).
    out_fused = jax.block_until_ready(channel_gate_pallas(x, w1, b1, w2, b2))
    assert out_fused.shape == (B, C, H, W)
    assert jnp.allclose(out_fused, ref, atol=1e-5, rtol=1e-5), "fused path mismatch"

    # Tiled two-pass fallback (forced, with >1 N-chunk to exercise accumulation).
    out_tiled = jax.block_until_ready(
        channel_gate_pallas(x, w1, b1, w2, b2, tile_n=128, force_two_pass=True))
    assert out_tiled.shape == (B, C, H, W)
    assert jnp.allclose(out_tiled, ref, atol=1e-5, rtol=1e-5), "tiled path mismatch"

    print("KERNEL_OK")
</pallas_src>

<mosaic_0001>
module attributes {stable_mosaic.version = 11 : i64} {
  func.func @_fused_kernel(%arg0: i32, %arg1: memref<1x64x256xf32, #tpu.memory_space<vmem>>, %arg2: memref<4x64xf32, #tpu.memory_space<vmem>>, %arg3: memref<4x1xf32, #tpu.memory_space<vmem>>, %arg4: memref<64x4xf32, #tpu.memory_space<vmem>>, %arg5: memref<64x1xf32, #tpu.memory_space<vmem>>, %arg6: memref<1x64x256xf32, #tpu.memory_space<vmem>>) attributes {dimension_semantics = [#tpu.dimension_semantics<parallel>], iteration_bounds = array<i64: 2>, scalar_prefetch = 0 : i64, scratch_operands = 0 : i64, tpu.core_type = #tpu.core_type<tc>, window_params = [{transform_indices = @transform_0, window_bounds = array<i64: 1, 64, 256>}, {pipeline_mode = #tpu.pipeline_mode<synchronous>, transform_indices = @transform_1, window_bounds = array<i64: 4, 64>}, {pipeline_mode = #tpu.pipeline_mode<synchronous>, transform_indices = @transform_2, window_bounds = array<i64: 4, 1>}, {pipeline_mode = #tpu.pipeline_mode<synchronous>, transform_indices = @transform_3, window_bounds = array<i64: 64, 4>}, {pipeline_mode = #tpu.pipeline_mode<synchronous>, transform_indices = @transform_4, window_bounds = array<i64: 64, 1>}, {transform_indices = @transform_5, window_bounds = array<i64: 1, 64, 256>}]} {
    %c0 = arith.constant 0 : index
    %c0_0 = arith.constant 0 : index
    %c0_1 = arith.constant 0 : index
    %0 = vector.load %arg1[%c0, %c0_0, %c0_1] : memref<1x64x256xf32, #tpu.memory_space<vmem>>, vector<1x64x256xf32>
    %1 = vector.shape_cast %0 : vector<1x64x256xf32> to vector<64x256xf32>
    %cst = arith.constant dense<0.000000e+00> : vector<64xf32>
    %2 = vector.multi_reduction <add>, %1, %cst [1] : vector<64x256xf32> to vector<64xf32>
    %3 = vector.shape_cast %2 : vector<64xf32> to vector<64x1xf32>
    %cst_2 = arith.constant 3.906250e-03 : f32
    %4 = vector.broadcast %cst_2 : f32 to vector<64x1xf32>
    %5 = arith.mulf %3, %4 : vector<64x1xf32>
    %cst_3 = arith.constant dense<0xFF800000> : vector<64xf32>
    %6 = vector.multi_reduction <maximumf>, %1, %cst_3 [1] : vector<64x256xf32> to vector<64xf32>
    %7 = vector.shape_cast %6 : vector<64xf32> to vector<64x1xf32>
    %c0_4 = arith.constant 0 : index
    %c0_5 = arith.constant 0 : index
    %8 = vector.load %arg2[%c0_4, %c0_5] : memref<4x64xf32, #tpu.memory_space<vmem>>, vector<4x64xf32>
    %c0_6 = arith.constant 0 : index
    %c0_7 = arith.constant 0 : index
    %9 = vector.load %arg3[%c0_6, %c0_7] : memref<4x1xf32, #tpu.memory_space<vmem>>, vector<4x1xf32>
    %c0_8 = arith.constant 0 : index
    %c0_9 = arith.constant 0 : index
    %10 = vector.load %arg4[%c0_8, %c0_9] : memref<64x4xf32, #tpu.memory_space<vmem>>, vector<64x4xf32>
    %c0_10 = arith.constant 0 : index
    %c0_11 = arith.constant 0 : index
    %11 = vector.load %arg5[%c0_10, %c0_11] : memref<64x1xf32, #tpu.memory_space<vmem>>, vector<64x1xf32>
    %cst_12 = arith.constant dense<0.000000e+00> : vector<4x1xf32>
    %12 = tpu.matmul %8, %5, %cst_12 {dimension_numbers = #tpu.dot_dimension_numbers<[1], [0], [0], [1], [0, 0, 1, 1], [], []>} : vector<4x64xf32>, vector<64x1xf32>, vector<4x1xf32> -> vector<4x1xf32>
    %13 = arith.addf %12, %9 : vector<4x1xf32>
    %cst_13 = arith.constant 0.000000e+00 : f32
    %14 = vector.broadcast %cst_13 : f32 to vector<4x1xf32>
    %15 = arith.maximumf %13, %14 : vector<4x1xf32>
    %cst_14 = arith.constant dense<0.000000e+00> : vector<4x1xf32>
    %16 = tpu.matmul %8, %7, %cst_14 {dimension_numbers = #tpu.dot_dimension_numbers<[1], [0], [0], [1], [0, 0, 1, 1], [], []>} : vector<4x64xf32>, vector<64x1xf32>, vector<4x1xf32> -> vector<4x1xf32>
    %17 = arith.addf %16, %9 : vector<4x1xf32>
    %cst_15 = arith.constant 0.000000e+00 : f32
    %18 = vector.broadcast %cst_15 : f32 to vector<4x1xf32>
    %19 = arith.maximumf %17, %18 : vector<4x1xf32>
    %20 = arith.addf %15, %19 : vector<4x1xf32>
    %cst_16 = arith.constant dense<0.000000e+00> : vector<64x1xf32>
    %21 = tpu.matmul %10, %20, %cst_16 {dimension_numbers = #tpu.dot_dimension_numbers<[1], [0], [0], [1], [0, 0, 1, 1], [], []>} : vector<64x4xf32>, vector<4x1xf32>, vector<64x1xf32> -> vector<64x1xf32>
    %cst_17 = arith.constant 2.000000e+00 : f32
    %22 = vector.broadcast %cst_17 : f32 to vector<64x1xf32>
    %23 = arith.mulf %22, %11 : vector<64x1xf32>
    %24 = arith.addf %21, %23 : vector<64x1xf32>
    %cst_18 = arith.constant 0.000000e+00 : f32
    %25 = vector.broadcast %cst_18 : f32 to vector<64x1xf32>
    %26 = arith.subf %25, %24 : vector<64x1xf32>
    %27 = math.exp %26 : vector<64x1xf32>
    %cst_19 = arith.constant 1.000000e+00 : f32
    %28 = vector.broadcast %cst_19 : f32 to vector<64x1xf32>
    %29 = arith.addf %28, %27 : vector<64x1xf32>
    %cst_20 = arith.constant 1.000000e+00 : f32
    %30 = vector.broadcast %cst_20 : f32 to vector<64x1xf32>
    %31 = arith.divf %30, %29 : vector<64x1xf32>
    %32 = vector.broadcast %31 : vector<64x1xf32> to vector<64x256xf32>
    %33 = arith.mulf %1, %32 : vector<64x256xf32>
    %c0_21 = arith.constant 0 : index
    %c0_22 = arith.constant 0 : index
    %c0_23 = arith.constant 0 : index
    %34 = vector.load %arg6[%c0_21, %c0_22, %c0_23] : memref<1x64x256xf32, #tpu.memory_space<vmem>>, vector<1x64x256xf32>
    %35 = vector.shape_cast %34 : vector<1x64x256xf32> to vector<64x256xf32>
    %36 = vector.shape_cast %33 : vector<64x256xf32> to vector<1x64x256xf32>
    tpu.vector_store %arg6[%c0_21, %c0_22, %c0_23], %36 {strides = array<i32>} : memref<1x64x256xf32, #tpu.memory_space<vmem>>, vector<1x64x256xf32>,
    return
  }
  func.func @transform_0(%arg0: i32) -> (i32, i32, i32) {
    %c0_i32 = arith.constant 0 : i32
    %c0_i32_0 = arith.constant 0 : i32
    %c0_i32_1 = arith.constant 0 : i32
    return %arg0, %c0_i32, %c0_i32_0 : i32, i32, i32
  }
  func.func @transform_1(%arg0: i32) -> (i32, i32) {
    %c0_i32 = arith.constant 0 : i32
    %c0_i32_0 = arith.constant 0 : i32
    %c0_i32_1 = arith.constant 0 : i32
    return %c0_i32, %c0_i32_0 : i32, i32
  }
  func.func @transform_2(%arg0: i32) -> (i32, i32) {
    %c0_i32 = arith.constant 0 : i32
    %c0_i32_0 = arith.constant 0 : i32
    %c0_i32_1 = arith.constant 0 : i32
    return %c0_i32, %c0_i32_0 : i32, i32
  }
  func.func @transform_3(%arg0: i32) -> (i32, i32) {
    %c0_i32 = arith.constant 0 : i32
    %c0_i32_0 = arith.constant 0 : i32
    %c0_i32_1 = arith.constant 0 : i32
    return %c0_i32, %c0_i32_0 : i32, i32
  }
  func.func @transform_4(%arg0: i32) -> (i32, i32) {
    %c0_i32 = arith.constant 0 : i32
    %c0_i32_0 = arith.constant 0 : i32
    %c0_i32_1 = arith.constant 0 : i32
    return %c0_i32, %c0_i32_0 : i32, i32
  }
  func.func @transform_5(%arg0: i32) -> (i32, i32, i32) {
    %c0_i32 = arith.constant 0 : i32
    %c0_i32_0 = arith.constant 0 : i32
    %c0_i32_1 = arith.constant 0 : i32
    return %arg0, %c0_i32, %c0_i32_0 : i32, i32, i32
  }
}

</mosaic_0001>

<llo_original>
// kernel: tpu_custom_call.1
$region0: #{tpu_custom_call.1}
  #allocation0 [shape = 'u32[]', space=smem, size = 0x4, offset = 0x4, fixed_abs, tag = 'smem constant byte address 0x4 - core index']
  #allocation1 [shape = 'u32[72,128]{1,0:T(1,128)}', space=vmem, size = 0x9000, scoped, tag = 'internal scratch']
  %s0 = inlined_call_operand.hbm [shape: f32[2,64,256], index: 0, kind: input, shape index: {}]
  %s1 = inlined_call_operand.vmem [shape: f32[4,64], index: 1, kind: input, shape index: {}]
  %s2 = inlined_call_operand.vmem [shape: f32[4,1], index: 2, kind: input, shape index: {}]
  %s3 = inlined_call_operand.vmem [shape: f32[64,4], index: 3, kind: input, shape index: {}]
  %s4 = inlined_call_operand.vmem [shape: f32[64,1], index: 4, kind: input, shape index: {}]
  %s5 = inlined_call_operand.hbm [shape: f32[2,64,256], index: 5, kind: output, shape index: {}]
  %s6 = sld [smem:[#allocation0]]
  $region57: #{tpu_custom_call.1} parent=0
    _
  %s8 = ssub.s32 1, %s6
  %s9 = scalar_select 0, %s8, %s6
  $region1: #{tpu_custom_call.1} parent=0
    #allocation2 [shape = 'u8[131072]{0}', space=vmem, size = 0x20000, scoped, tag = 'input window, operand 0']
    #allocation3 [shape = 's32[2]{0}', space=sflag, size = 0x8, scoped, tag = 'scoped memory for tpu_custom_call.1']
    #allocation4 [shape = 's32[2]{0}', space=sflag, size = 0x8, scoped, tag = 'scoped memory for tpu_custom_call.1']
    #allocation5 [shape = 'u8[131072]{0}', space=vmem, size = 0x20000, scoped, tag = 'output window, operand 0']
    %10 = vsyncpa [#allocation3], 0
    %s11 = scalar_lea.sflag [#allocation3], 1
    %12 = vsyncpa %s11, 0
    %13 = vsyncpa [#allocation4], 0
    %s14 = scalar_lea.sflag [#allocation4], 1
    %15 = vsyncpa %s14, 0
    loop: start=0, step=1, limit=4
    $region2: #{tpu_custom_call.1} parent=1 // loop_pre_header
      _
    $region3: #{tpu_custom_call.1} parent=1 // loop_header
      %s17 = sphi 0, %s21
      %p18 = scmp.ge.s32.totalorder %s17, 4
      %s27 = sphi 0, %s29
      %s30 = sphi 0, %s27
      %s31 = sphi 0, %s30
      %s47 = sphi 0, %s31
      %s51 = sphi 0, %s51
      %s53 = sphi 0, %s51
      %s54 = sphi 0, %s53
      %s68 = sphi 0, %s54
      %s72 = sphi 0, %s72
      %s74 = sphi 0, %s72
      %s75 = sphi 0, %s74
      %s89 = sphi 0, %s75
      %s93 = sphi 0, %s93
      %s95 = sphi 0, %s93
      %s96 = sphi 0, %s95
      %s110 = sphi 0, %s96
      %s114 = sphi 0, %s114
      %s116 = sphi 0, %s114
      %s117 = sphi 0, %s116
      %s131 = sphi 0, %s117
      %s137 = sphi 0, %s139
      %s140 = sphi 0, %s137
      %s141 = sphi 0, %s140
      %s157 = sphi 0, %s141
    $region4: #{tpu_custom_call.1} parent=1 // loop_header_branch
      %20 = sbr.rel (%p18) target = $region8
    $region5: #{tpu_custom_call.1} parent=1 // loop_body
      %s22 = ssub.s32 %s17, 1
      %s23 = ssub.s32 %s17, 2
      %s24 = sadd.s32 %s17, 1
      %s25 = ssub.s32 %s17, %s24
      %p26 = scmp.eq.s32.totalorder %s25, 0
      %s28 = sadd.s32 %s27, 1
      %s29 = scalar_select %p26, %s27, %s28
      %p32 = pneg %p26
      %p33 = scmp.eq.s32.totalorder %s17, 1
      %p34 = por %p32, %p33
      %p35 = scmp.ne.s32.totalorder %s27, %s30
      %p36 = scmp.eq.s32.totalorder %s17, 0
      %p37 = por %p35, %p36
      %p38 = scmp.ne.s32.totalorder %s27, %s30
      %p39 = scmp.eq.s32.totalorder %s22, 1
      %p40 = por %p38, %p39
      %p41 = scmp.ne.s32.totalorder %s30, %s31
      %p42 = scmp.eq.s32.totalorder %s22, 0
      %p43 = por %p41, %p42
      %p44 = scmp.ne.s32.totalorder %s30, %s31
      %p45 = scmp.eq.s32.totalorder %s23, 1
      %p46 = por %p44, %p45
      %p48 = scmp.ne.s32.totalorder %s31, %s47
      %p49 = scmp.eq.s32.totalorder %s23, 0
      %p50 = por %p48, %p49
      %s52 = sadd.s32 %s51, 1
      %p55 = scmp.eq.s32.totalorder %s17, 1
      %p56 = scmp.ne.s32.totalorder %s51, %s53
      %p57 = scmp.eq.s32.totalorder %s17, 0
      %p58 = por %p56, %p57
      %p59 = scmp.ne.s32.totalorder %s51, %s53
      %p60 = scmp.eq.s32.totalorder %s22, 1
      %p61 = por %p59, %p60
      %p62 = scmp.ne.s32.totalorder %s53, %s54
      %p63 = scmp.eq.s32.totalorder %s22, 0
      %p64 = por %p62, %p63
      %p65 = scmp.ne.s32.totalorder %s53, %s54
      %p66 = scmp.eq.s32.totalorder %s23, 1
      %p67 = por %p65, %p66
      %p69 = scmp.ne.s32.totalorder %s54, %s68
      %p70 = scmp.eq.s32.totalorder %s23, 0
      %p71 = por %p69, %p70
      %s73 = sadd.s32 %s72, 1
      %p76 = scmp.eq.s32.totalorder %s17, 1
      %p77 = scmp.ne.s32.totalorder %s72, %s74
      %p78 = scmp.eq.s32.totalorder %s17, 0
      %p79 = por %p77, %p78
      %p80 = scmp.ne.s32.totalorder %s72, %s74
      %p81 = scmp.eq.s32.totalorder %s22, 1
      %p82 = por %p80, %p81
      %p83 = scmp.ne.s32.totalorder %s74, %s75
      %p84 = scmp.eq.s32.totalorder %s22, 0
      %p85 = por %p83, %p84
      %p86 = scmp.ne.s32.totalorder %s74, %s75
      %p87 = scmp.eq.s32.totalorder %s23, 1
      %p88 = por %p86, %p87
      %p90 = scmp.ne.s32.totalorder %s75, %s89
      %p91 = scmp.eq.s32.totalorder %s23, 0
      %p92 = por %p90, %p91
      %s94 = sadd.s32 %s93, 1
      %p97 = scmp.eq.s32.totalorder %s17, 1
      %p98 = scmp.ne.s32.totalorder %s93, %s95
      %p99 = scmp.eq.s32.totalorder %s17, 0
      %p100 = por %p98, %p99
      %p101 = scmp.ne.s32.totalorder %s93, %s95
      %p102 = scmp.eq.s32.totalorder %s22, 1
      %p103 = por %p101, %p102
      %p104 = scmp.ne.s32.totalorder %s95, %s96
      %p105 = scmp.eq.s32.totalorder %s22, 0
      %p106 = por %p104, %p105
      %p107 = scmp.ne.s32.totalorder %s95, %s96
      %p108 = scmp.eq.s32.totalorder %s23, 1
      %p109 = por %p107, %p108
      %p111 = scmp.ne.s32.totalorder %s96, %s110
      %p112 = scmp.eq.s32.totalorder %s23, 0
      %p113 = por %p111, %p112
      %s115 = sadd.s32 %s114, 1
      %p118 = scmp.eq.s32.totalorder %s17, 1
      %p119 = scmp.ne.s32.totalorder %s114, %s116
      %p120 = scmp.eq.s32.totalorder %s17, 0
      %p121 = por %p119, %p120
      %p122 = scmp.ne.s32.totalorder %s114, %s116
      %p123 = scmp.eq.s32.totalorder %s22, 1
      %p124 = por %p122, %p123
      %p125 = scmp.ne.s32.totalorder %s116, %s117
      %p126 = scmp.eq.s32.totalorder %s22, 0
      %p127 = por %p125, %p126
      %p128 = scmp.ne.s32.totalorder %s116, %s117
      %p129 = scmp.eq.s32.totalorder %s23, 1
      %p130 = por %p128, %p129
      %p132 = scmp.ne.s32.totalorder %s117, %s131
      %p133 = scmp.eq.s32.totalorder %s23, 0
      %p134 = por %p132, %p133
      %s135 = ssub.s32 %s17, %s24
      %p136 = scmp.eq.s32.totalorder %s135, 0
      %s138 = sadd.s32 %s137, 1
      %s139 = scalar_select %p136, %s137, %s138
      %p142 = pneg %p136
      %p143 = scmp.eq.s32.totalorder %s17, 1
      %p144 = por %p142, %p143
      %p145 = scmp.ne.s32.totalorder %s137, %s140
      %p146 = scmp.eq.s32.totalorder %s17, 0
      %p147 = por %p145, %p146
      %p148 = scmp.ne.s32.totalorder %s137, %s140
      %p149 = scmp.eq.s32.totalorder %s22, 1
      %p150 = por %p148, %p149
      %p151 = scmp.ne.s32.totalorder %s140, %s141
      %p152 = scmp.eq.s32.totalorder %s22, 0
      %p153 = por %p151, %p152
      %p154 = scmp.ne.s32.totalorder %s140, %s141
      %p155 = scmp.eq.s32.totalorder %s23, 1
      %p156 = por %p154, %p155
      %p158 = scmp.ne.s32.totalorder %s141, %s157
      %p159 = scmp.eq.s32.totalorder %s23, 0
      %p160 = por %p158, %p159
      %p161 = scmp.le.s32.totalorder 1, %s17
      %p162 = scmp.lt.s32.totalorder %s17, 3
      %p163 = pnand %p161, %p162
      %p164 = pneg %p163
      // Predicated region
      $region9: #{tpu_custom_call.1} parent=5 // pred_check
        _
      $region10: #{tpu_custom_call.1} parent=5 // pred_check_branch
        %166 = sbr.rel (%p163) target = $region12
      $region11: #{tpu_custom_call.1} parent=5 // pred_region
        %s167 = ssub.s32 %s17, 1
        // Predicated region
        $region13: #{tpu_custom_call.1} parent=11 // pred_check
          %p168 = pneg %p64
        $region14: #{tpu_custom_call.1} parent=11 // pred_check_branch
          %170 = sbr.rel (%p168) target = $region16
        $region15: #{tpu_custom_call.1} parent=11 // pred_region
          _
        $region16: #{tpu_custom_call.1} parent=11 // pred_fallthru
          _
        // Predicated region
        $region17: #{tpu_custom_call.1} parent=11 // pred_check
          %p171 = pneg %p85
        $region18: #{tpu_custom_call.1} parent=11 // pred_check_branch
          %173 = sbr.rel (%p171) target = $region20
        $region19: #{tpu_custom_call.1} parent=11 // pred_region
          _
        $region20: #{tpu_custom_call.1} parent=11 // pred_fallthru
          _
        // Predicated region
        $region21: #{tpu_custom_call.1} parent=11 // pred_check
          %p174 = pneg %p106
        $region22: #{tpu_custom_call.1} parent=11 // pred_check_branch
          %176 = sbr.rel (%p174) target = $region24
        $region23: #{tpu_custom_call.1} parent=11 // pred_region
          _
        $region24: #{tpu_custom_call.1} parent=11 // pred_fallthru
          _
        // Predicated region
        $region25: #{tpu_custom_call.1} parent=11 // pred_check
          %p177 = pneg %p127
        $region26: #{tpu_custom_call.1} parent=11 // pred_check_branch
          %179 = sbr.rel (%p177) target = $region28
        $region27: #{tpu_custom_call.1} parent=11 // pred_region
          _
        $region28: #{tpu_custom_call.1} parent=11 // pred_fallthru
          _
      $region12: #{tpu_custom_call.1} parent=5 // pred_fallthru
        _
      %p180 = scmp.lt.s32.totalorder %s17, 2
      // Predicated region
      $region29: #{tpu_custom_call.1} parent=5 // pred_check
        %p181 = pneg %p180
      $region30: #{tpu_custom_call.1} parent=5 // pred_check_branch
        %183 = sbr.rel (%p181) target = $region32
      $region31: #{tpu_custom_call.1} parent=5 // pred_region
        // Predicated region
        $region33: #{tpu_custom_call.1} parent=31 // pred_check
          %p184 = pneg %p37
        $region34: #{tpu_custom_call.1} parent=31 // pred_check_branch
          %186 = sbr.rel (%p184) target = $region36
        $region35: #{tpu_custom_call.1} parent=31 // pred_region
          %s187 = sand.u32 %s27, 1
          %s188 = scalar_lea.sflag [#allocation3], %s187
          %s189 = sand.u32 %s27, 1
          %s190 = smul.addr %s189, 128
          %s191 = scalar_lea.vmem [#allocation2], %s190
          %193 = vsyncadd %s188, 0
          %s194 = smul.addr %s17, 16
          %s195 = smul.addr %s194, 8
          %s196 = scalar_lea.hbm %s0, %s195
          %s197 = sshll.u32 %s196, 4
          %s198 = int_to_ptr.hbm [resolvable:$true] %s197
          %s199 = sshll.u32 %s191, 4
          %s200 = int_to_ptr.vmem [resolvable:$true] %s199
          %205 = dma.hbm_to_vmem [thread:$0]  %s198, 2048, %s200, %s188, 256, 256, 16
        $region36: #{tpu_custom_call.1} parent=31 // pred_fallthru
          _
      $region32: #{tpu_custom_call.1} parent=5 // pred_fallthru
        _
      %p206 = scmp.le.s32.totalorder 1, %s17
      %p207 = scmp.lt.s32.totalorder %s17, 3
      %p208 = pnand %p206, %p207
      %p209 = pneg %p208
      // Predicated region
      $region37: #{tpu_custom_call.1} parent=5 // pred_check
        _
      $region38: #{tpu_custom_call.1} parent=5 // pred_check_branch
        %211 = sbr.rel (%p208) target = $region40
      $region39: #{tpu_custom_call.1} parent=5 // pred_region
        %s212 = ssub.s32 %s17, 1
        %s213 = sand.u32 %s30, 1
        %s214 = scalar_lea.sflag [#allocation3], %s213
        %s215 = sand.u32 %s30, 1
        %s216 = smul.addr %s215, 128
        %s217 = scalar_lea.vmem [#allocation2], %s216
        // Predicated region
        $region41: #{tpu_custom_call.1} parent=39 // pred_check
          %p218 = pneg %p43
        $region42: #{tpu_custom_call.1} parent=39 // pred_check_branch
          %220 = sbr.rel (%p218) target = $region44
        $region43: #{tpu_custom_call.1} parent=39 // pred_region
          %222 = dma.done %s214, 2048
        $region44: #{tpu_custom_call.1} parent=39 // pred_fallthru
          _
        %s223 = sand.u32 %s30, 1
        %s224 = scalar_lea.sflag [#allocation3], %s223
        %s225 = sand.u32 %s30, 1
        %s226 = smul.addr %s225, 128
        %s227 = scalar_lea.vmem [#allocation2], %s226
        %p228 = pneg %p43
        %p229 = pneg %p40
        %p230 = pneg %p64
        %p231 = pneg %p61
        %p232 = pneg %p85
        %p233 = pneg %p82
        %p234 = pneg %p106
        %p235 = pneg %p103
        %p236 = pneg %p127
        %p237 = pneg %p124
        %p238 = pneg %p153
        %p239 = pneg %p150
        %s240 = sand.u32 %s140, 1
        %s241 = scalar_lea.sflag [#allocation4], %s240
        %s242 = sand.u32 %s140, 1
        %s243 = smul.addr %s242, 128
        %s244 = scalar_lea.vmem [#allocation5], %s243
        %v245 = vld [vmem:[%s217] sm:$0xff]
        %v246 = vld [vmem:[%s217 + $0x8] sm:$0xff]
        %v247 = vld [vmem:[%s217 + $0x10] sm:$0xff]
        %v248 = vld [vmem:[%s217 + $0x18] sm:$0xff]
        %v249 = vld [vmem:[%s217 + $0x20] sm:$0xff]
        %v250 = vld [vmem:[%s217 + $0x28] sm:$0xff]
        %v251 = vld [vmem:[%s217 + $0x30] sm:$0xff]
        %v252 = vld [vmem:[%s217 + $0x38] sm:$0xff]
        %v253 = vld [vmem:[%s217 + $0x40] sm:$0xff]
        %v254 = vld [vmem:[%s217 + $0x48] sm:$0xff]
        %v255 = vld [vmem:[%s217 + $0x50] sm:$0xff]
        %v256 = vld [vmem:[%s217 + $0x58] sm:$0xff]
        %v257 = vld [vmem:[%s217 + $0x60] sm:$0xff]
        %v258 = vld [vmem:[%s217 + $0x68] sm:$0xff]
        %v259 = vld [vmem:[%s217 + $0x70] sm:$0xff]
        %v260 = vld [vmem:[%s217 + $0x78] sm:$0xff]
        %v261 = vadd.f32 %v245, %v246
        %262 = vadd.xlane.f32.xlu0 %v261
        %v263 = vpop.xlane.xlu0 %262
        %v264 = vadd.f32 %v247, %v248
        %265 = vadd.xlane.f32.xlu0 %v264
        %v266 = vpop.xlane.xlu0 %265
        %v267 = vadd.f32 %v249, %v250
        %268 = vadd.xlane.f32.xlu0 %v267
        %v269 = vpop.xlane.xlu0 %268
        %v270 = vadd.f32 %v251, %v252
        %271 = vadd.xlane.f32.xlu0 %v270
        %v272 = vpop.xlane.xlu0 %271
        %v273 = vadd.f32 %v253, %v254
        %274 = vadd.xlane.f32.xlu0 %v273
        %v275 = vpop.xlane.xlu0 %274
        %v276 = vadd.f32 %v255, %v256
        %277 = vadd.xlane.f32.xlu0 %v276
        %v278 = vpop.xlane.xlu0 %277
        %v279 = vadd.f32 %v257, %v258
        %280 = vadd.xlane.f32.xlu0 %v279
        %v281 = vpop.xlane.xlu0 %280
        %v282 = vadd.f32 %v259, %v260
        %283 = vadd.xlane.f32.xlu0 %v282
        %v284 = vpop.xlane.xlu0 %283
        %v285 = vmul.f32 %v263, 0.00390625
        %v286 = vmul.f32 %v266, 0.00390625
        %v287 = vmul.f32 %v269, 0.00390625
        %v288 = vmul.f32 %v272, 0.00390625
        %v289 = vmul.f32 %v275, 0.00390625
        %v290 = vmul.f32 %v278, 0.00390625
        %v291 = vmul.f32 %v281, 0.00390625
        %v292 = vmul.f32 %v284, 0.00390625
        %v293 = vmax.f32 %v245, %v246
        %294 = vmax.xlane.f32.xlu0 %v293
        %v295 = vpop.xlane.xlu0 %294
        %v296 = vmax.f32 %v247, %v248
        %297 = vmax.xlane.f32.xlu0 %v296
        %v298 = vpop.xlane.xlu0 %297
        %v299 = vmax.f32 %v249, %v250
        %300 = vmax.xlane.f32.xlu0 %v299
        %v301 = vpop.xlane.xlu0 %300
        %v302 = vmax.f32 %v251, %v252
        %303 = vmax.xlane.f32.xlu0 %v302
        %v304 = vpop.xlane.xlu0 %303
        %v305 = vmax.f32 %v253, %v254
        %306 = vmax.xlane.f32.xlu0 %v305
        %v307 = vpop.xlane.xlu0 %306
        %v308 = vmax.f32 %v255, %v256
        %309 = vmax.xlane.f32.xlu0 %v308
        %v310 = vpop.xlane.xlu0 %309
        %v311 = vmax.f32 %v257, %v258
        %312 = vmax.xlane.f32.xlu0 %v311
        %v313 = vpop.xlane.xlu0 %312
        %v314 = vmax.f32 %v259, %v260
        %315 = vmax.xlane.f32.xlu0 %v314
        %v316 = vpop.xlane.xlu0 %315
        %v317 = vld [vmem:[%s1] sm:$0xf]
        %v318 = vld [vmem:[%s2] sm:$0xf]
        %v319 = vld [vmem:[%s3] sm:$0xff]
        %v320 = vld [vmem:[%s3 + $0x8] sm:$0xff]
        %v321 = vld [vmem:[%s3 + $0x10] sm:$0xff]
        %v322 = vld [vmem:[%s3 + $0x18] sm:$0xff]
        %v323 = vld [vmem:[%s3 + $0x20] sm:$0xff]
        %v324 = vld [vmem:[%s3 + $0x28] sm:$0xff]
        %v325 = vld [vmem:[%s3 + $0x30] sm:$0xff]
        %v326 = vld [vmem:[%s3 + $0x38] sm:$0xff]
        %v327 = vld [vmem:[%s4] sm:$0xff]
        %v328 = vld [vmem:[%s4 + $0x8] sm:$0xff]
        %v329 = vld [vmem:[%s4 + $0x10] sm:$0xff]
        %v330 = vld [vmem:[%s4 + $0x18] sm:$0xff]
        %v331 = vld [vmem:[%s4 + $0x20] sm:$0xff]
        %v332 = vld [vmem:[%s4 + $0x28] sm:$0xff]
        %v333 = vld [vmem:[%s4 + $0x30] sm:$0xff]
        %v334 = vld [vmem:[%s4 + $0x38] sm:$0xff]
        %vm335 = vcmask 523264
        %v337 = vsel %vm335, %v317, 0
        %339 = vmatpush.msra.mxu0 0.0
        %340 = vmatpush.msra.mxu0 0.0
        %341 = vmatpush.msra.mxu0 0.0
        %342 = vmatpush.msra.mxu0 0.0
        %343 = vmatpush.msra.mxu0 0.0
        %344 = vmatpush.msra.mxu0 0.0
        %345 = vmatpush.msra.mxu0 0.0
        %346 = vmatpush.msra.mxu0 0.0
        %347 = vmatpush.msra.mxu0 %v292
        %348 = vmatpush.msra.mxu0 %v291
        %349 = vmatpush.msra.mxu0 %v290
        %350 = vmatpush.msra.mxu0 %v289
        %351 = vmatpush.msra.mxu0 %v288
        %352 = vmatpush.msra.mxu0 %v287
        %353 = vmatpush.msra.mxu0 %v286
        %354 = vmatpush.msra.mxu0 %v285
        %355 = vmatmul.f32.gmra.mxu0 %v337
        %v356 = vpop.f32.mrf.mxu0
        %v357 = vadd.f32 %v318, %v356
        %358 = vdwg.mxu0
        %v359 = vmax.f32 %v357, 0.0
        %360 = vmatpush.msra.mxu0 0.0
        %361 = vmatpush.msra.mxu0 0.0
        %362 = vmatpush.msra.mxu0 0.0
        %363 = vmatpush.msra.mxu0 0.0
        %364 = vmatpush.msra.mxu0 0.0
        %365 = vmatpush.msra.mxu0 0.0
        %366 = vmatpush.msra.mxu0 0.0
        %367 = vmatpush.msra.mxu0 0.0
        %368 = vmatpush.msra.mxu0 %v316
        %369 = vmatpush.msra.mxu0 %v313
        %370 = vmatpush.msra.mxu0 %v310
        %371 = vmatpush.msra.mxu0 %v307
        %372 = vmatpush.msra.mxu0 %v304
        %373 = vmatpush.msra.mxu0 %v301
        %374 = vmatpush.msra.mxu0 %v298
        %375 = vmatpush.msra.mxu0 %v295
        %376 = vmatmul.f32.gmra.mxu0 %v337
        %v377 = vpop.f32.mrf.mxu0
        %v378 = vadd.f32 %v318, %v377
        %379 = vdwg.mxu0
        %v380 = vmax.f32 %v378, 0.0
        %v381 = vadd.f32 %v359, %v380
        %v382 = vmul.f32 %v327, 2.0
        %v383 = vmul.f32 %v328, 2.0
        %v384 = vmul.f32 %v329, 2.0
        %v385 = vmul.f32 %v330, 2.0
        %v386 = vmul.f32 %v331, 2.0
        %v387 = vmul.f32 %v332, 2.0
        %v388 = vmul.f32 %v333, 2.0
        %v389 = vmul.f32 %v334, 2.0
        %vm390 = vcmask 31744
        %v392 = vsel %vm390, %v319, 0
        %v395 = vsel %vm390, %v320, 0
        %v398 = vsel %vm390, %v321, 0
        %v401 = vsel %vm390, %v322, 0
        %v404 = vsel %vm390, %v323, 0
        %v407 = vsel %vm390, %v324, 0
        %v410 = vsel %vm390, %v325, 0
        %v413 = vsel %vm390, %v326, 0
        %vm415 = vcmask 1043456
        %v417 = vsel %vm415, %v381, 0
        %419 = vmatpush.msra.mxu0 0.0
        %420 = vmatpush.msra.mxu0 0.0
        %421 = vmatpush.msra.mxu0 0.0
        %422 = vmatpush.msra.mxu0 0.0
        %423 = vmatpush.msra.mxu0 0.0
        %424 = vmatpush.msra.mxu0 0.0
        %425 = vmatpush.msra.mxu0 0.0
        %426 = vmatpush.msra.mxu0 0.0
        %427 = vmatpush.msra.mxu0 0.0
        %428 = vmatpush.msra.mxu0 0.0
        %429 = vmatpush.msra.mxu0 0.0
        %430 = vmatpush.msra.mxu0 0.0
        %431 = vmatpush.msra.mxu0 0.0
        %432 = vmatpush.msra.mxu0 0.0
        %433 = vmatpush.msra.mxu0 0.0
        %434 = vmatpush.msra.mxu0 %v417
        %435 = vmatmul.f32.gmra.mxu0 %v392
        %v436 = vpop.f32.mrf.mxu0
        %v437 = vadd.f32 %v382, %v436
        %438 = vmatmul.f32.gmra.mxu0 %v395
        %v439 = vpop.f32.mrf.mxu0
        %v440 = vadd.f32 %v383, %v439
        %441 = vmatmul.f32.gmra.mxu0 %v398
        %v442 = vpop.f32.mrf.mxu0
        %v443 = vadd.f32 %v384, %v442
        %444 = vmatmul.f32.gmra.mxu0 %v401
        %v445 = vpop.f32.mrf.mxu0
        %v446 = vadd.f32 %v385, %v445
        %447 = vmatmul.f32.gmra.mxu0 %v404
        %v448 = vpop.f32.mrf.mxu0
        %v449 = vadd.f32 %v386, %v448
        %450 = vmatmul.f32.gmra.mxu0 %v407
        %v451 = vpop.f32.mrf.mxu0
        %v452 = vadd.f32 %v387, %v451
        %453 = vmatmul.f32.gmra.mxu0 %v410
        %v454 = vpop.f32.mrf.mxu0
        %v455 = vadd.f32 %v388, %v454
        %456 = vmatmul.f32.gmra.mxu0 %v413
        %v457 = vpop.f32.mrf.mxu0
        %v458 = vadd.f32 %v389, %v457
        %459 = vdwg.mxu0
        %v460 = vsub.f32 0.0, %v437
        %v461 = vsub.f32 0.0, %v440
        %v462 = vsub.f32 0.0, %v443
        %v463 = vsub.f32 0.0, %v446
        %v464 = vsub.f32 0.0, %v449
        %v465 = vsub.f32 0.0, %v452
        %v466 = vsub.f32 0.0, %v455
        %v467 = vsub.f32 0.0, %v458
        %v468 = vmul.f32 %v460, 1.442695
        %v469 = vpow.pop %v468
        %v470 = vmul.f32 %v461, 1.442695
        %v471 = vpow.pop %v470
        %v472 = vmul.f32 %v462, 1.442695
        %v473 = vpow.pop %v472
        %v474 = vmul.f32 %v463, 1.442695
        %v475 = vpow.pop %v474
        %v476 = vmul.f32 %v464, 1.442695
        %v477 = vpow.pop %v476
        %v478 = vmul.f32 %v465, 1.442695
        %v479 = vpow.pop %v478
        %v480 = vmul.f32 %v466, 1.442695
        %v481 = vpow.pop %v480
        %v482 = vmul.f32 %v467, 1.442695
        %v483 = vpow.pop %v482
        %v484 = vadd.f32 %v469, 1.0
        %v485 = vadd.f32 %v471, 1.0
        %v486 = vadd.f32 %v473, 1.0
        %v487 = vadd.f32 %v475, 1.0
        %v488 = vadd.f32 %v477, 1.0
        %v489 = vadd.f32 %v479, 1.0
        %v490 = vadd.f32 %v481, 1.0
        %v491 = vadd.f32 %v483, 1.0
        %v492 = vrcp.pop %v484
        %v493 = vmul.f32 %v484, %v492
        %v494 = vsub.f32 1.0, %v493
        %v495 = vmul.f32 %v492, %v494
        %v496 = vadd.f32 %v492, %v495
        %vm497 = vweird.f32 %v484
        %vm498 = vweird.f32 %v492
        %vm499 = vmor %vm497, %vm498
        %v500 = vsel %vm499, %v492, %v496
        %v501 = vand.u32 2147483647, %v484
        %vm502 = vcmp.eq.f32.partialorder %v501, 8.507059e+37
        %v503 = vand.u32 %v484, 2147483648
        %v504 = vor.u32 1.1754944e-38, %v503
        %v505 = vsel %vm502, %v504, %v500
        %v506 = vmul.f32 1.0, %v505
        %v507 = vrcp.pop %v485
        %v508 = vmul.f32 %v485, %v507
        %v509 = vsub.f32 1.0, %v508
        %v510 = vmul.f32 %v507, %v509
        %v511 = vadd.f32 %v507, %v510
        %vm512 = vweird.f32 %v485
        %vm513 = vweird.f32 %v507
        %vm514 = vmor %vm512, %vm513
        %v515 = vsel %vm514, %v507, %v511
        %v516 = vand.u32 2147483647, %v485
        %vm517 = vcmp.eq.f32.partialorder %v516, 8.507059e+37
        %v518 = vand.u32 %v485, 2147483648
        %v519 = vor.u32 1.1754944e-38, %v518
        %v520 = vsel %vm517, %v519, %v515
        %v521 = vmul.f32 1.0, %v520
        %v522 = vrcp.pop %v486
        %v523 = vmul.f32 %v486, %v522
        %v524 = vsub.f32 1.0, %v523
        %v525 = vmul.f32 %v522, %v524
        %v526 = vadd.f32 %v522, %v525
        %vm527 = vweird.f32 %v486
        %vm528 = vweird.f32 %v522
        %vm529 = vmor %vm527, %vm528
        %v530 = vsel %vm529, %v522, %v526
        %v531 = vand.u32 2147483647, %v486
        %vm532 = vcmp.eq.f32.partialorder %v531, 8.507059e+37
        %v533 = vand.u32 %v486, 2147483648
        %v534 = vor.u32 1.1754944e-38, %v533
        %v535 = vsel %vm532, %v534, %v530
        %v536 = vmul.f32 1.0, %v535
        %v537 = vrcp.pop %v487
        %v538 = vmul.f32 %v487, %v537
        %v539 = vsub.f32 1.0, %v538
        %v540 = vmul.f32 %v537, %v539
        %v541 = vadd.f32 %v537, %v540
        %vm542 = vweird.f32 %v487
        %vm543 = vweird.f32 %v537
        %vm544 = vmor %vm542, %vm543
        %v545 = vsel %vm544, %v537, %v541
        %v546 = vand.u32 2147483647, %v487
        %vm547 = vcmp.eq.f32.partialorder %v546, 8.507059e+37
        %v548 = vand.u32 %v487, 2147483648
        %v549 = vor.u32 1.1754944e-38, %v548
        %v550 = vsel %vm547, %v549, %v545
        %v551 = vmul.f32 1.0, %v550
        %v552 = vrcp.pop %v488
        %v553 = vmul.f32 %v488, %v552
        %v554 = vsub.f32 1.0, %v553
        %v555 = vmul.f32 %v552, %v554
        %v556 = vadd.f32 %v552, %v555
        %vm557 = vweird.f32 %v488
        %vm558 = vweird.f32 %v552
        %vm559 = vmor %vm557, %vm558
        %v560 = vsel %vm559, %v552, %v556
        %v561 = vand.u32 2147483647, %v488
        %vm562 = vcmp.eq.f32.partialorder %v561, 8.507059e+37
        %v563 = vand.u32 %v488, 2147483648
        %v564 = vor.u32 1.1754944e-38, %v563
        %v565 = vsel %vm562, %v564, %v560
        %v566 = vmul.f32 1.0, %v565
        %v567 = vrcp.pop %v489
        %v568 = vmul.f32 %v489, %v567
        %v569 = vsub.f32 1.0, %v568
        %v570 = vmul.f32 %v567, %v569
        %v571 = vadd.f32 %v567, %v570
        %vm572 = vweird.f32 %v489
        %vm573 = vweird.f32 %v567
        %vm574 = vmor %vm572, %vm573
        %v575 = vsel %vm574, %v567, %v571
        %v576 = vand.u32 2147483647, %v489
        %vm577 = vcmp.eq.f32.partialorder %v576, 8.507059e+37
        %v578 = vand.u32 %v489, 2147483648
        %v579 = vor.u32 1.1754944e-38, %v578
        %v580 = vsel %vm577, %v579, %v575
        %v581 = vmul.f32 1.0, %v580
        %v582 = vrcp.pop %v490
        %v583 = vmul.f32 %v490, %v582
        %v584 = vsub.f32 1.0, %v583
        %v585 = vmul.f32 %v582, %v584
        %v586 = vadd.f32 %v582, %v585
        %vm587 = vweird.f32 %v490
        %vm588 = vweird.f32 %v582
        %vm589 = vmor %vm587, %vm588
        %v590 = vsel %vm589, %v582, %v586
        %v591 = vand.u32 2147483647, %v490
        %vm592 = vcmp.eq.f32.partialorder %v591, 8.507059e+37
        %v593 = vand.u32 %v490, 2147483648
        %v594 = vor.u32 1.1754944e-38, %v593
        %v595 = vsel %vm592, %v594, %v590
        %v596 = vmul.f32 1.0, %v595
        %v597 = vrcp.pop %v491
        %v598 = vmul.f32 %v491, %v597
        %v599 = vsub.f32 1.0, %v598
        %v600 = vmul.f32 %v597, %v599
        %v601 = vadd.f32 %v597, %v600
        %vm602 = vweird.f32 %v491
        %vm603 = vweird.f32 %v597
        %vm604 = vmor %vm602, %vm603
        %v605 = vsel %vm604, %v597, %v601
        %v606 = vand.u32 2147483647, %v491
        %vm607 = vcmp.eq.f32.partialorder %v606, 8.507059e+37
        %v608 = vand.u32 %v491, 2147483648
        %v609 = vor.u32 1.1754944e-38, %v608
        %v610 = vsel %vm607, %v609, %v605
        %v611 = vmul.f32 1.0, %v610
        %613 = vset.pattern.permute.xlu0 0
        %614 = vperm.xlu0 %613, %v506
        %v615 = vpop.permute.xlu0 %614
        %618 = vset.pattern.permute.xlu0 0
        %619 = vperm.xlu0 %618, %v521
        %v620 = vpop.permute.xlu0 %619
        %623 = vset.pattern.permute.xlu0 0
        %624 = vperm.xlu0 %623, %v536
        %v625 = vpop.permute.xlu0 %624
        %628 = vset.pattern.permute.xlu0 0
        %629 = vperm.xlu0 %628, %v551
        %v630 = vpop.permute.xlu0 %629
        %633 = vset.pattern.permute.xlu0 0
        %634 = vperm.xlu0 %633, %v566
        %v635 = vpop.permute.xlu0 %634
        %638 = vset.pattern.permute.xlu0 0
        %639 = vperm.xlu0 %638, %v581
        %v640 = vpop.permute.xlu0 %639
        %643 = vset.pattern.permute.xlu0 0
        %644 = vperm.xlu0 %643, %v596
        %v645 = vpop.permute.xlu0 %644
        %648 = vset.pattern.permute.xlu0 0
        %649 = vperm.xlu0 %648, %v611
        %v650 = vpop.permute.xlu0 %649
        %v652 = vmul.f32 %v245, %v615
        %v653 = vmul.f32 %v246, %v615
        %v654 = vmul.f32 %v247, %v620
        %v655 = vmul.f32 %v248, %v620
        %v656 = vmul.f32 %v249, %v625
        %v657 = vmul.f32 %v250, %v625
        %v658 = vmul.f32 %v251, %v630
        %v659 = vmul.f32 %v252, %v630
        %v660 = vmul.f32 %v253, %v635
        %v661 = vmul.f32 %v254, %v635
        %v662 = vmul.f32 %v255, %v640
        %v663 = vmul.f32 %v256, %v640
        %v664 = vmul.f32 %v257, %v645
        %v665 = vmul.f32 %v258, %v645
        %v666 = vmul.f32 %v259, %v650
        %v667 = vmul.f32 %v260, %v650
        %668 = vst [vmem:[%s244] sm:$0xff] %v652
        %669 = vst [vmem:[%s244 + $0x8] sm:$0xff] %v653
        %670 = vst [vmem:[%s244 + $0x10] sm:$0xff] %v654
        %671 = vst [vmem:[%s244 + $0x18] sm:$0xff] %v655
        %672 = vst [vmem:[%s244 + $0x20] sm:$0xff] %v656
        %673 = vst [vmem:[%s244 + $0x28] sm:$0xff] %v657
        %674 = vst [vmem:[%s244 + $0x30] sm:$0xff] %v658
        %675 = vst [vmem:[%s244 + $0x38] sm:$0xff] %v659
        %676 = vst [vmem:[%s244 + $0x40] sm:$0xff] %v660
        %677 = vst [vmem:[%s244 + $0x48] sm:$0xff] %v661
        %678 = vst [vmem:[%s244 + $0x50] sm:$0xff] %v662
        %679 = vst [vmem:[%s244 + $0x58] sm:$0xff] %v663
        %680 = vst [vmem:[%s244 + $0x60] sm:$0xff] %v664
        %681 = vst [vmem:[%s244 + $0x68] sm:$0xff] %v665
        %682 = vst [vmem:[%s244 + $0x70] sm:$0xff] %v666
        %683 = vst [vmem:[%s244 + $0x78] sm:$0xff] %v667
        %s684 = sand.u32 %s140, 1
        %s685 = scalar_lea.sflag [#allocation4], %s684
        %s686 = sand.u32 %s140, 1
        %s687 = smul.addr %s686, 128
        %s688 = scalar_lea.vmem [#allocation5], %s687
        // Predicated region
        $region45: #{tpu_custom_call.1} parent=39 // pred_check
          %p689 = pneg %p150
        $region46: #{tpu_custom_call.1} parent=39 // pred_check_branch
          %691 = sbr.rel (%p689) target = $region48
        $region47: #{tpu_custom_call.1} parent=39 // pred_region
          %693 = vsyncadd %s685, 0
          %s694 = smul.addr %s22, 16
          %s695 = smul.addr %s694, 8
          %s696 = scalar_lea.hbm %s5, %s695
          %s697 = sshll.u32 %s688, 4
          %s698 = int_to_ptr.vmem [resolvable:$true] %s697
          %s699 = sshll.u32 %s696, 4
          %s700 = int_to_ptr.hbm [resolvable:$true] %s699
          %705 = dma.vmem_to_hbm [thread:$0]  %s698, 2048, %s700, %s685, 256, 256, 16
        $region48: #{tpu_custom_call.1} parent=39 // pred_fallthru
          _
      $region40: #{tpu_custom_call.1} parent=5 // pred_fallthru
        _
      %p706 = scmp.le.s32.totalorder 2, %s17
      // Predicated region
      $region49: #{tpu_custom_call.1} parent=5 // pred_check
        %p707 = pneg %p706
      $region50: #{tpu_custom_call.1} parent=5 // pred_check_branch
        %709 = sbr.rel (%p707) target = $region52
      $region51: #{tpu_custom_call.1} parent=5 // pred_region
        %s710 = ssub.s32 %s17, 2
        // Predicated region
        $region53: #{tpu_custom_call.1} parent=51 // pred_check
          %p711 = pneg %p156
        $region54: #{tpu_custom_call.1} parent=51 // pred_check_branch
          %713 = sbr.rel (%p711) target = $region56
        $region55: #{tpu_custom_call.1} parent=51 // pred_region
          %s714 = sand.u32 %s141, 1
          %s715 = scalar_lea.sflag [#allocation4], %s714
          %s716 = sand.u32 %s141, 1
          %s717 = smul.addr %s716, 128
          %s718 = scalar_lea.vmem [#allocation5], %s717
          %720 = dma.done %s715, 2048
        $region56: #{tpu_custom_call.1} parent=51 // pred_fallthru
          _
      $region52: #{tpu_custom_call.1} parent=5 // pred_fallthru
        _
    $region6: #{tpu_custom_call.1} parent=1 // loop_footer
      %s21 = sadd.s32 1, %s17
    $region7: #{tpu_custom_call.1} parent=1 // loop_footer_branch
      %16 = sbr.rel target = $region3
    $region8: #{tpu_custom_call.1} parent=1 // loop_exit
      _
    %721 = vsyncpa [#allocation3], 1
    %s722 = scalar_lea.sflag [#allocation3], 1
    %723 = vsyncpa %s722, 1
    %724 = vsyncpa [#allocation4], 1
    %s725 = scalar_lea.sflag [#allocation4], 1
    %726 = vsyncpa %s725, 1

</llo_original>
